<compile_context>
chip_gen: v7x
topology: tpu7x:2x2x1
jax: 0.10.0
libtpu: 0.0.40
codegen_flags: <defaults>
</compile_context>

<pallas_src>
import numpy as np
import jax
import jax.numpy as jnp
from jax.experimental import pallas as pl
from jax.experimental.pallas import tpu as pltpu


def _make_kernel(num_conv_layers, num_fc_layers):
    def kernel(x_ref, *refs):
        out_ref = refs[-1]
        prm = refs[:-1]            # (w, b) per conv layer, then (w, b) per FC layer

        g = x_ref[...]             # (TB, L0) bf16, flat l-major layout

        # ---- conv stack: each layer = one matmul + bias + ReLU + halves-max pool ----
        for i in range(num_conv_layers):
            w_ref, b_ref = prm[2 * i], prm[2 * i + 1]     # A: (Lin*Cin, 2*Lp*Cout) bf16
            half = w_ref.shape[1] // 2
            y = jnp.dot(g.astype(jnp.bfloat16), w_ref[...],
                        preferred_element_type=jnp.float32) + b_ref[...]
            y = jnp.maximum(y, 0.0)                        # ReLU
            g = jnp.maximum(y[:, :half], y[:, half:])      # MaxPool2d((2,1),(2,1))

        # ---- FC stack (f32): (Linear -> ReLU -> Dropout[id])*(n-1) -> Linear ----
        base = 2 * num_conv_layers
        for j in range(num_fc_layers):
            w_ref, b_ref = prm[base + 2 * j], prm[base + 2 * j + 1]
            g = jnp.dot(g, w_ref[...], preferred_element_type=jnp.float32) + b_ref[...]
            if j < num_fc_layers - 1:
                g = jnp.maximum(g, 0.0)

        # numerically stable sigmoid
        z = jnp.exp(-jnp.abs(g))
        out_ref[...] = jnp.where(g >= 0.0, 1.0 / (1.0 + z), z / (1.0 + z))

    return kernel


def _fold_conv_layer(w_pt, b_pt, Lin, Cin, pad=1):
    """Fold Conv2d((K,1), pad=(1,0)) + the MaxPool row pairing into a dense matrix
    acting on the flat l-major layout.  Output columns are ordered
    [even rows | odd rows] so the pool becomes a max of the two contiguous halves."""
    w = np.asarray(w_pt, np.float32)          # (Cout, Cin, K, 1)
    b = np.asarray(b_pt, np.float32)          # (Cout,)
    Cout, _, K, _ = w.shape
    Lout = Lin + 2 * pad - K + 1
    Lp = (Lout - 2) // 2 + 1
    A = np.zeros((Lin * Cin, 2 * Lp * Cout), np.float32)
    for s in range(2):                        # parity of the pre-pool output row
        for p in range(Lp):
            l_out = 2 * p + s
            col0 = (s * Lp + p) * Cout
            for k in range(K):
                l_in = l_out + k - pad        # zero padding handled by skipping rows
                if 0 <= l_in < Lin:
                    A[l_in * Cin:(l_in + 1) * Cin, col0:col0 + Cout] = w[:, :, k, 0].T
    b_flat = np.tile(b, 2 * Lp)[None, :]      # (1, 2*Lp*Cout)
    return A, b_flat, Lp, Cout


def deepstarr_forward(x_nchw, conv_params, fc_params, batch_tile=1024):
    """x_nchw: (B, 1, L0, 1).  conv_params: [(w:(Cout,Cin,K,1), b:(Cout,))...],
       fc_params: [(w:(out,in), b:(out,))...]  (PyTorch layouts)."""
    B = x_nchw.shape[0]
    L0 = x_nchw.shape[2]
    assert x_nchw.shape[1] == 1 and x_nchw.shape[3] == 1

    # flat l-major input (Cin = 1): (B, L0); bf16 operands for the conv MXU matmul
    x_flat = jnp.asarray(x_nchw)[:, 0, :, 0].astype(jnp.bfloat16)

    # ---- fold conv layers into dense per-layer matrices on the host ----
    kernel_inputs = []
    Lin, Cin = L0, 1
    for (w_pt, b_pt) in conv_params:
        A, b_flat, Lp, Cout = _fold_conv_layer(w_pt, b_pt, Lin, Cin)
        kernel_inputs.append(jnp.asarray(A, jnp.bfloat16))
        kernel_inputs.append(jnp.asarray(b_flat, jnp.float32))
        Lin, Cin = Lp, Cout

    # ---- FC weights; permute the first one's input dim to undo channel-major Flatten ----
    Lp_f, C_f = Lin, Cin
    assert fc_params[0][0].shape[1] == Lp_f * C_f, \
        (fc_params[0][0].shape, Lp_f, C_f)
    for i, (w_pt, b_pt) in enumerate(fc_params):
        w = np.asarray(w_pt, np.float32)                  # (out, in)
        out_dim = w.shape[0]
        if i == 0:
            # PyTorch flatten index = c*Lp + l; kernel layout index = l*C + c
            w_k = w.reshape(out_dim, C_f, Lp_f).transpose(2, 1, 0).reshape(Lp_f * C_f, out_dim)
        else:
            w_k = w.T
        kernel_inputs.append(jnp.asarray(w_k, jnp.float32))
        kernel_inputs.append(jnp.asarray(np.asarray(b_pt, np.float32)[None, :], jnp.float32))
    out_dim = fc_params[-1][0].shape[0]

    # ---- batch grid ----
    TB = int(min(batch_tile, max(8, pl.cdiv(B, 8) * 8)))
    TB = max(8, (TB // 8) * 8)                            # multiple of 8 (sublane rule)
    B_pad = pl.cdiv(B, TB) * TB
    if B_pad != B:
        x_flat = jnp.concatenate(
            [x_flat, jnp.zeros((B_pad - B, L0), x_flat.dtype)], axis=0)

    in_specs = [pl.BlockSpec((TB, L0), lambda i: (i, 0))]
    for a in kernel_inputs:                               # weights/biases: VMEM-resident
        in_specs.append(pl.BlockSpec(a.shape, lambda i: (0, 0)))
    out_specs = pl.BlockSpec((TB, out_dim), lambda i: (i, 0))

    out = pl.pallas_call(
        _make_kernel(len(conv_params), len(fc_params)),
        grid=(B_pad // TB,),
        in_specs=in_specs,
        out_specs=out_specs,
        out_shape=jax.ShapeDtypeStruct((B_pad, out_dim), jnp.float32),
        compiler_params=pltpu.CompilerParams(dimension_semantics=("parallel",)),
    )(x_flat, *kernel_inputs)
    return out[:B]


def ref_forward(x_nchw, conv_params, fc_params):
    """Pure numpy reference matching PyTorch semantics (eval mode)."""
    x = np.asarray(x_nchw, np.float32)                    # (B, Cin, H, 1)
    for (w, b) in conv_params:
        Bn, Cin, H, _ = x.shape
        Cout, _, K, _ = w.shape
        xpad = np.pad(x, ((0, 0), (0, 0), (1, 1), (0, 0)))
        Hout = H + 2 - K + 1
        y = np.zeros((Bn, Cout, Hout, 1), np.float32)
        for l in range(Hout):
            patch = xpad[:, :, l:l + K, 0]                # (B, Cin, K)
            y[:, :, l, 0] = np.einsum('bik,oik->bo', patch, w[:, :, :, 0]) + b
        y = np.maximum(y, 0.0)
        Hp = (Hout - 2) // 2 + 1
        y = np.maximum(y[:, :, 0:2 * Hp:2, :], y[:, :, 1:2 * Hp:2, :])
        x = y
    h = x.reshape(x.shape[0], -1)
    for i, (w, b) in enumerate(fc_params):
        h = h @ w.T + b
        if i < len(fc_params) - 1:
            h = np.maximum(h, 0.0)
    return 1.0 / (1.0 + np.exp(-h))


if __name__ == "__main__":
    # Small but consistent with the module's constructor (num_features = 31).
    B = 20                     # > TB so the batch grid + padding path is exercised
    NUM_FILTERS = 8
    KERNEL_SIZE = 3
    NUM_CONV_LAYERS = 2
    NUM_FC_LAYERS = 2
    NUM_FEATURES = 31
    DROPOUT_RATE = 0.1         # unused at inference

    key = jax.random.PRNGKey(0)
    keys = jax.random.split(key, 16)
    x = jax.random.normal(keys[0], (B, 1, NUM_FEATURES, 1), dtype=jnp.float32)

    # Deterministic synthetic parameters in PyTorch layouts.
    conv_params = []
    in_c, kidx = 1, 1
    for _ in range(NUM_CONV_LAYERS):
        w = 0.1 * jax.random.normal(keys[kidx], (NUM_FILTERS, in_c, KERNEL_SIZE, 1), jnp.float32); kidx += 1
        b = 0.05 * jax.random.normal(keys[kidx], (NUM_FILTERS,), jnp.float32); kidx += 1
        conv_params.append((w, b))
        in_c = NUM_FILTERS

    L = NUM_FEATURES
    for _ in range(NUM_CONV_LAYERS):
        L = (L + 2 * 1 - KERNEL_SIZE) // 1 + 1
        L = (L - 2) // 2 + 1
    fc_in = NUM_FILTERS * L * 1

    fc_params = []
    d_in = fc_in
    for _ in range(NUM_FC_LAYERS - 1):
        w = 0.1 * jax.random.normal(keys[kidx], (256, d_in), jnp.float32); kidx += 1
        b = 0.05 * jax.random.normal(keys[kidx], (256,), jnp.float32); kidx += 1
        fc_params.append((w, b))
        d_in = 256
    w = 0.1 * jax.random.normal(keys[kidx], (1, d_in), jnp.float32); kidx += 1
    b = 0.05 * jax.random.normal(keys[kidx], (1,), jnp.float32); kidx += 1
    fc_params.append((w, b))

    # batch_tile=8 -> 3 grid steps (B padded to 24): exercises tiling + pipelining.
    out = deepstarr_forward(x, conv_params, fc_params, batch_tile=8)
    out = jax.block_until_ready(out)

    ref = ref_forward(np.asarray(x),
                      [(np.asarray(w), np.asarray(b)) for w, b in conv_params],
                      [(np.asarray(w), np.asarray(b)) for w, b in fc_params])

    assert out.shape == (B, 1), out.shape
    np.testing.assert_allclose(np.asarray(out), ref, rtol=1e-2, atol=5e-3)
    print("KERNEL_OK")
</pallas_src>

<mosaic_0001>
module attributes {stable_mosaic.version = 11 : i64} {
  func.func @kernel(%arg0: i32, %arg1: memref<8x31xbf16, #tpu.memory_space<vmem>>, %arg2: memref<31x240xbf16, #tpu.memory_space<vmem>>, %arg3: memref<1x240xf32, #tpu.memory_space<vmem>>, %arg4: memref<120x112xbf16, #tpu.memory_space<vmem>>, %arg5: memref<1x112xf32, #tpu.memory_space<vmem>>, %arg6: memref<56x256xf32, #tpu.memory_space<vmem>>, %arg7: memref<1x256xf32, #tpu.memory_space<vmem>>, %arg8: memref<256x1xf32, #tpu.memory_space<vmem>>, %arg9: memref<1x1xf32, #tpu.memory_space<vmem>>, %arg10: memref<8x1xf32, #tpu.memory_space<vmem>>) attributes {dimension_semantics = [#tpu.dimension_semantics<parallel>], iteration_bounds = array<i64: 3>, scalar_prefetch = 0 : i64, scratch_operands = 0 : i64, tpu.core_type = #tpu.core_type<tc>, window_params = [{transform_indices = @transform_0, window_bounds = array<i64: 8, 31>}, {pipeline_mode = #tpu.pipeline_mode<synchronous>, transform_indices = @transform_1, window_bounds = array<i64: 31, 240>}, {pipeline_mode = #tpu.pipeline_mode<synchronous>, transform_indices = @transform_2, window_bounds = array<i64: 1, 240>}, {pipeline_mode = #tpu.pipeline_mode<synchronous>, transform_indices = @transform_3, window_bounds = array<i64: 120, 112>}, {pipeline_mode = #tpu.pipeline_mode<synchronous>, transform_indices = @transform_4, window_bounds = array<i64: 1, 112>}, {pipeline_mode = #tpu.pipeline_mode<synchronous>, transform_indices = @transform_5, window_bounds = array<i64: 56, 256>}, {pipeline_mode = #tpu.pipeline_mode<synchronous>, transform_indices = @transform_6, window_bounds = array<i64: 1, 256>}, {pipeline_mode = #tpu.pipeline_mode<synchronous>, transform_indices = @transform_7, window_bounds = array<i64: 256, 1>}, {pipeline_mode = #tpu.pipeline_mode<synchronous>, transform_indices = @transform_8, window_bounds = array<i64: 1, 1>}, {transform_indices = @transform_9, window_bounds = array<i64: 8, 1>}]} {
    %c0 = arith.constant 0 : index
    %c0_0 = arith.constant 0 : index
    %0 = vector.load %arg1[%c0, %c0_0] : memref<8x31xbf16, #tpu.memory_space<vmem>>, vector<8x31xbf16>
    %c0_1 = arith.constant 0 : index
    %c0_2 = arith.constant 0 : index
    %1 = vector.load %arg2[%c0_1, %c0_2] : memref<31x240xbf16, #tpu.memory_space<vmem>>, vector<31x240xbf16>
    %cst = arith.constant dense<0.000000e+00> : vector<8x240xf32>
    %2 = tpu.matmul %0, %1, %cst {dimension_numbers = #tpu.dot_dimension_numbers<[1], [0], [0], [1], [0, 0, 1, 1], [], []>} : vector<8x31xbf16>, vector<31x240xbf16>, vector<8x240xf32> -> vector<8x240xf32>
    %c0_3 = arith.constant 0 : index
    %c0_4 = arith.constant 0 : index
    %3 = vector.load %arg3[%c0_3, %c0_4] : memref<1x240xf32, #tpu.memory_space<vmem>>, vector<1x240xf32>
    %4 = vector.broadcast %3 : vector<1x240xf32> to vector<8x240xf32>
    %5 = arith.addf %2, %4 : vector<8x240xf32>
    %cst_5 = arith.constant 0.000000e+00 : f32
    %6 = vector.broadcast %cst_5 : f32 to vector<8x240xf32>
    %7 = arith.maximumf %5, %6 : vector<8x240xf32>
    %8 = vector.extract_strided_slice %7 {offsets = [0, 0], sizes = [8, 120], strides = [1, 1]} : vector<8x240xf32> to vector<8x120xf32>
    %9 = vector.extract_strided_slice %7 {offsets = [0, 120], sizes = [8, 120], strides = [1, 1]} : vector<8x240xf32> to vector<8x120xf32>
    %10 = arith.maximumf %8, %9 : vector<8x120xf32>
    %11 = arith.truncf %10 : vector<8x120xf32> to vector<8x120xbf16>
    %c0_6 = arith.constant 0 : index
    %c0_7 = arith.constant 0 : index
    %12 = vector.load %arg4[%c0_6, %c0_7] : memref<120x112xbf16, #tpu.memory_space<vmem>>, vector<120x112xbf16>
    %cst_8 = arith.constant dense<0.000000e+00> : vector<8x112xf32>
    %13 = tpu.matmul %11, %12, %cst_8 {dimension_numbers = #tpu.dot_dimension_numbers<[1], [0], [0], [1], [0, 0, 1, 1], [], []>} : vector<8x120xbf16>, vector<120x112xbf16>, vector<8x112xf32> -> vector<8x112xf32>
    %c0_9 = arith.constant 0 : index
    %c0_10 = arith.constant 0 : index
    %14 = vector.load %arg5[%c0_9, %c0_10] : memref<1x112xf32, #tpu.memory_space<vmem>>, vector<1x112xf32>
    %15 = vector.broadcast %14 : vector<1x112xf32> to vector<8x112xf32>
    %16 = arith.addf %13, %15 : vector<8x112xf32>
    %cst_11 = arith.constant 0.000000e+00 : f32
    %17 = vector.broadcast %cst_11 : f32 to vector<8x112xf32>
    %18 = arith.maximumf %16, %17 : vector<8x112xf32>
    %19 = vector.extract_strided_slice %18 {offsets = [0, 0], sizes = [8, 56], strides = [1, 1]} : vector<8x112xf32> to vector<8x56xf32>
    %20 = vector.extract_strided_slice %18 {offsets = [0, 56], sizes = [8, 56], strides = [1, 1]} : vector<8x112xf32> to vector<8x56xf32>
    %21 = arith.maximumf %19, %20 : vector<8x56xf32>
    %c0_12 = arith.constant 0 : index
    %c0_13 = arith.constant 0 : index
    %22 = vector.load %arg6[%c0_12, %c0_13] : memref<56x256xf32, #tpu.memory_space<vmem>>, vector<56x256xf32>
    %cst_14 = arith.constant dense<0.000000e+00> : vector<8x256xf32>
    %23 = tpu.matmul %21, %22, %cst_14 {dimension_numbers = #tpu.dot_dimension_numbers<[1], [0], [0], [1], [0, 0, 1, 1], [], []>} : vector<8x56xf32>, vector<56x256xf32>, vector<8x256xf32> -> vector<8x256xf32>
    %c0_15 = arith.constant 0 : index
    %c0_16 = arith.constant 0 : index
    %24 = vector.load %arg7[%c0_15, %c0_16] : memref<1x256xf32, #tpu.memory_space<vmem>>, vector<1x256xf32>
    %25 = vector.broadcast %24 : vector<1x256xf32> to vector<8x256xf32>
    %26 = arith.addf %23, %25 : vector<8x256xf32>
    %cst_17 = arith.constant 0.000000e+00 : f32
    %27 = vector.broadcast %cst_17 : f32 to vector<8x256xf32>
    %28 = arith.maximumf %26, %27 : vector<8x256xf32>
    %c0_18 = arith.constant 0 : index
    %c0_19 = arith.constant 0 : index
    %29 = vector.load %arg8[%c0_18, %c0_19] : memref<256x1xf32, #tpu.memory_space<vmem>>, vector<256x1xf32>
    %cst_20 = arith.constant dense<0.000000e+00> : vector<8x1xf32>
    %30 = tpu.matmul %28, %29, %cst_20 {dimension_numbers = #tpu.dot_dimension_numbers<[1], [0], [0], [1], [0, 0, 1, 1], [], []>} : vector<8x256xf32>, vector<256x1xf32>, vector<8x1xf32> -> vector<8x1xf32>
    %c0_21 = arith.constant 0 : index
    %c0_22 = arith.constant 0 : index
    %31 = vector.load %arg9[%c0_21, %c0_22] : memref<1x1xf32, #tpu.memory_space<vmem>>, vector<1x1xf32>
    %32 = vector.broadcast %31 : vector<1x1xf32> to vector<8x1xf32>
    %33 = arith.addf %30, %32 : vector<8x1xf32>
    %34 = math.absf %33 : vector<8x1xf32>
    %cst_23 = arith.constant 0.000000e+00 : f32
    %35 = vector.broadcast %cst_23 : f32 to vector<8x1xf32>
    %36 = arith.subf %35, %34 : vector<8x1xf32>
    %37 = math.exp %36 : vector<8x1xf32>
    %cst_24 = arith.constant 0.000000e+00 : f32
    %38 = vector.broadcast %cst_24 : f32 to vector<8x1xf32>
    %39 = arith.cmpf oge, %33, %38 : vector<8x1xf32>
    %cst_25 = arith.constant 1.000000e+00 : f32
    %40 = vector.broadcast %cst_25 : f32 to vector<8x1xf32>
    %41 = arith.addf %40, %37 : vector<8x1xf32>
    %cst_26 = arith.constant 1.000000e+00 : f32
    %42 = vector.broadcast %cst_26 : f32 to vector<8x1xf32>
    %43 = arith.divf %42, %41 : vector<8x1xf32>
    %cst_27 = arith.constant 1.000000e+00 : f32
    %44 = vector.broadcast %cst_27 : f32 to vector<8x1xf32>
    %45 = arith.addf %44, %37 : vector<8x1xf32>
    %46 = arith.divf %37, %45 : vector<8x1xf32>
    %47 = arith.select %39, %43, %46 : vector<8x1xi1>, vector<8x1xf32>
    %c0_28 = arith.constant 0 : index
    %c0_29 = arith.constant 0 : index
    %48 = vector.load %arg10[%c0_28, %c0_29] : memref<8x1xf32, #tpu.memory_space<vmem>>, vector<8x1xf32>
    tpu.vector_store %arg10[%c0_28, %c0_29], %47 {strides = array<i32>} : memref<8x1xf32, #tpu.memory_space<vmem>>, vector<8x1xf32>,
    return
  }
  func.func @transform_0(%arg0: i32) -> (i32, i32) {
    %c0_i32 = arith.constant 0 : i32
    %c0_i32_0 = arith.constant 0 : i32
    return %arg0, %c0_i32 : i32, i32
  }
  func.func @transform_1(%arg0: i32) -> (i32, i32) {
    %c0_i32 = arith.constant 0 : i32
    %c0_i32_0 = arith.constant 0 : i32
    %c0_i32_1 = arith.constant 0 : i32
    return %c0_i32, %c0_i32_0 : i32, i32
  }
  func.func @transform_2(%arg0: i32) -> (i32, i32) {
    %c0_i32 = arith.constant 0 : i32
    %c0_i32_0 = arith.constant 0 : i32
    %c0_i32_1 = arith.constant 0 : i32
    return %c0_i32, %c0_i32_0 : i32, i32
  }
  func.func @transform_3(%arg0: i32) -> (i32, i32) {
    %c0_i32 = arith.constant 0 : i32
    %c0_i32_0 = arith.constant 0 : i32
    %c0_i32_1 = arith.constant 0 : i32
    return %c0_i32, %c0_i32_0 : i32, i32
  }
  func.func @transform_4(%arg0: i32) -> (i32, i32) {
    %c0_i32 = arith.constant 0 : i32
    %c0_i32_0 = arith.constant 0 : i32
    %c0_i32_1 = arith.constant 0 : i32
    return %c0_i32, %c0_i32_0 : i32, i32
  }
  func.func @transform_5(%arg0: i32) -> (i32, i32) {
    %c0_i32 = arith.constant 0 : i32
    %c0_i32_0 = arith.constant 0 : i32
    %c0_i32_1 = arith.constant 0 : i32
    return %c0_i32, %c0_i32_0 : i32, i32
  }
  func.func @transform_6(%arg0: i32) -> (i32, i32) {
    %c0_i32 = arith.constant 0 : i32
    %c0_i32_0 = arith.constant 0 : i32
    %c0_i32_1 = arith.constant 0 : i32
    return %c0_i32, %c0_i32_0 : i32, i32
  }
  func.func @transform_7(%arg0: i32) -> (i32, i32) {
    %c0_i32 = arith.constant 0 : i32
    %c0_i32_0 = arith.constant 0 : i32
    %c0_i32_1 = arith.constant 0 : i32
    return %c0_i32, %c0_i32_0 : i32, i32
  }
  func.func @transform_8(%arg0: i32) -> (i32, i32) {
    %c0_i32 = arith.constant 0 : i32
    %c0_i32_0 = arith.constant 0 : i32
    %c0_i32_1 = arith.constant 0 : i32
    return %c0_i32, %c0_i32_0 : i32, i32
  }
  func.func @transform_9(%arg0: i32) -> (i32, i32) {
    %c0_i32 = arith.constant 0 : i32
    %c0_i32_0 = arith.constant 0 : i32
    return %arg0, %c0_i32 : i32, i32
  }
}

</mosaic_0001>

<llo_original>
// kernel: tpu_custom_call.1
$region0: #{tpu_custom_call.1}
  #allocation0 [shape = 'u32[]', space=smem, size = 0x4, offset = 0x4, fixed_abs, tag = 'smem constant byte address 0x4 - core index']
  #allocation1 [shape = 'u32[144,128]{1,0:T(1,128)}', space=vmem, size = 0x12000, scoped, tag = 'internal scratch']
  #allocation2 [shape = 'f32[1,1]{1,0:T(1,128)S(1)}', space=vmem, size = 0x200, scoped, tag = 'scoped memory for tpu_custom_call.1']
  %s0 = inlined_call_operand.vmem [shape: bf16[24,31], index: 0, kind: input, shape index: {}]
  %s1 = inlined_call_operand.vmem [shape: bf16[31,240], index: 1, kind: input, shape index: {}]
  %s2 = inlined_call_operand.vmem [shape: f32[1,240], index: 2, kind: input, shape index: {}]
  %s3 = inlined_call_operand.vmem [shape: bf16[120,112], index: 3, kind: input, shape index: {}]
  %s4 = inlined_call_operand.vmem [shape: f32[1,112], index: 4, kind: input, shape index: {}]
  %s5 = inlined_call_operand.vmem [shape: f32[56,256], index: 5, kind: input, shape index: {}]
  %s6 = inlined_call_operand.vmem [shape: f32[1,256], index: 6, kind: input, shape index: {}]
  %s7 = inlined_call_operand.vmem [shape: f32[256,1], index: 7, kind: input, shape index: {}]
  %s8 = inlined_call_operand.<no memory space> [shape: f32[1,1], index: 8, kind: input, shape index: {}]
  %s9 = inlined_call_operand.vmem [shape: f32[24,1], index: 9, kind: output, shape index: {}]
  %s10 = sld [smem:[#allocation0]]
  $region69: #{tpu_custom_call.1} parent=0
    _
  %s12 = ssub.s32 1, %s10
  %s13 = scalar_select 0, %s12, %s10
  %v14 = vstv %s8
  %15 = vst [vmem:[#allocation2] sm:$0x1] %v14
  loop: start=0, step=1, limit=5
  $region2: #{tpu_custom_call.1} parent=0 // loop_pre_header
    _
  $region3: #{tpu_custom_call.1} parent=0 // loop_header
    %s17 = sphi 0, %s21
    %p18 = scmp.ge.s32.totalorder %s17, 5
    %s27 = sphi 0, %s29
    %s30 = sphi 0, %s27
    %s31 = sphi 0, %s30
    %s47 = sphi 0, %s31
    %s51 = sphi 0, %s51
    %s53 = sphi 0, %s51
    %s54 = sphi 0, %s53
    %s68 = sphi 0, %s54
    %s72 = sphi 0, %s72
    %s74 = sphi 0, %s72
    %s75 = sphi 0, %s74
    %s89 = sphi 0, %s75
    %s93 = sphi 0, %s93
    %s95 = sphi 0, %s93
    %s96 = sphi 0, %s95
    %s110 = sphi 0, %s96
    %s114 = sphi 0, %s114
    %s116 = sphi 0, %s114
    %s117 = sphi 0, %s116
    %s131 = sphi 0, %s117
    %s135 = sphi 0, %s135
    %s137 = sphi 0, %s135
    %s138 = sphi 0, %s137
    %s152 = sphi 0, %s138
    %s156 = sphi 0, %s156
    %s158 = sphi 0, %s156
    %s159 = sphi 0, %s158
    %s173 = sphi 0, %s159
    %s177 = sphi 0, %s177
    %s179 = sphi 0, %s177
    %s180 = sphi 0, %s179
    %s194 = sphi 0, %s180
    %s198 = sphi 0, %s198
    %s200 = sphi 0, %s198
    %s201 = sphi 0, %s200
    %s215 = sphi 0, %s201
    %s221 = sphi 0, %s223
    %s224 = sphi 0, %s221
    %s225 = sphi 0, %s224
    %s241 = sphi 0, %s225
  $region4: #{tpu_custom_call.1} parent=0 // loop_header_branch
    %20 = sbr.rel (%p18) target = $region8
  $region5: #{tpu_custom_call.1} parent=0 // loop_body
    %s22 = ssub.s32 %s17, 1
    %s23 = ssub.s32 %s17, 2
    %s24 = sadd.s32 %s17, 1
    %s25 = ssub.s32 %s17, %s24
    %p26 = scmp.eq.s32.totalorder %s25, 0
    %s28 = sadd.s32 %s27, 1
    %s29 = scalar_select %p26, %s27, %s28
    %p32 = pneg %p26
    %p33 = scmp.eq.s32.totalorder %s17, 2
    %p34 = por %p32, %p33
    %p35 = scmp.ne.s32.totalorder %s27, %s30
    %p36 = scmp.eq.s32.totalorder %s17, 0
    %p37 = por %p35, %p36
    %p38 = scmp.ne.s32.totalorder %s27, %s30
    %p39 = scmp.eq.s32.totalorder %s22, 2
    %p40 = por %p38, %p39
    %p41 = scmp.ne.s32.totalorder %s30, %s31
    %p42 = scmp.eq.s32.totalorder %s22, 0
    %p43 = por %p41, %p42
    %p44 = scmp.ne.s32.totalorder %s30, %s31
    %p45 = scmp.eq.s32.totalorder %s23, 2
    %p46 = por %p44, %p45
    %p48 = scmp.ne.s32.totalorder %s31, %s47
    %p49 = scmp.eq.s32.totalorder %s23, 0
    %p50 = por %p48, %p49
    %s52 = sadd.s32 %s51, 1
    %p55 = scmp.eq.s32.totalorder %s17, 2
    %p56 = scmp.ne.s32.totalorder %s51, %s53
    %p57 = scmp.eq.s32.totalorder %s17, 0
    %p58 = por %p56, %p57
    %p59 = scmp.ne.s32.totalorder %s51, %s53
    %p60 = scmp.eq.s32.totalorder %s22, 2
    %p61 = por %p59, %p60
    %p62 = scmp.ne.s32.totalorder %s53, %s54
    %p63 = scmp.eq.s32.totalorder %s22, 0
    %p64 = por %p62, %p63
    %p65 = scmp.ne.s32.totalorder %s53, %s54
    %p66 = scmp.eq.s32.totalorder %s23, 2
    %p67 = por %p65, %p66
    %p69 = scmp.ne.s32.totalorder %s54, %s68
    %p70 = scmp.eq.s32.totalorder %s23, 0
    %p71 = por %p69, %p70
    %s73 = sadd.s32 %s72, 1
    %p76 = scmp.eq.s32.totalorder %s17, 2
    %p77 = scmp.ne.s32.totalorder %s72, %s74
    %p78 = scmp.eq.s32.totalorder %s17, 0
    %p79 = por %p77, %p78
    %p80 = scmp.ne.s32.totalorder %s72, %s74
    %p81 = scmp.eq.s32.totalorder %s22, 2
    %p82 = por %p80, %p81
    %p83 = scmp.ne.s32.totalorder %s74, %s75
    %p84 = scmp.eq.s32.totalorder %s22, 0
    %p85 = por %p83, %p84
    %p86 = scmp.ne.s32.totalorder %s74, %s75
    %p87 = scmp.eq.s32.totalorder %s23, 2
    %p88 = por %p86, %p87
    %p90 = scmp.ne.s32.totalorder %s75, %s89
    %p91 = scmp.eq.s32.totalorder %s23, 0
    %p92 = por %p90, %p91
    %s94 = sadd.s32 %s93, 1
    %p97 = scmp.eq.s32.totalorder %s17, 2
    %p98 = scmp.ne.s32.totalorder %s93, %s95
    %p99 = scmp.eq.s32.totalorder %s17, 0
    %p100 = por %p98, %p99
    %p101 = scmp.ne.s32.totalorder %s93, %s95
    %p102 = scmp.eq.s32.totalorder %s22, 2
    %p103 = por %p101, %p102
    %p104 = scmp.ne.s32.totalorder %s95, %s96
    %p105 = scmp.eq.s32.totalorder %s22, 0
    %p106 = por %p104, %p105
    %p107 = scmp.ne.s32.totalorder %s95, %s96
    %p108 = scmp.eq.s32.totalorder %s23, 2
    %p109 = por %p107, %p108
    %p111 = scmp.ne.s32.totalorder %s96, %s110
    %p112 = scmp.eq.s32.totalorder %s23, 0
    %p113 = por %p111, %p112
    %s115 = sadd.s32 %s114, 1
    %p118 = scmp.eq.s32.totalorder %s17, 2
    %p119 = scmp.ne.s32.totalorder %s114, %s116
    %p120 = scmp.eq.s32.totalorder %s17, 0
    %p121 = por %p119, %p120
    %p122 = scmp.ne.s32.totalorder %s114, %s116
    %p123 = scmp.eq.s32.totalorder %s22, 2
    %p124 = por %p122, %p123
    %p125 = scmp.ne.s32.totalorder %s116, %s117
    %p126 = scmp.eq.s32.totalorder %s22, 0
    %p127 = por %p125, %p126
    %p128 = scmp.ne.s32.totalorder %s116, %s117
    %p129 = scmp.eq.s32.totalorder %s23, 2
    %p130 = por %p128, %p129
    %p132 = scmp.ne.s32.totalorder %s117, %s131
    %p133 = scmp.eq.s32.totalorder %s23, 0
    %p134 = por %p132, %p133
    %s136 = sadd.s32 %s135, 1
    %p139 = scmp.eq.s32.totalorder %s17, 2
    %p140 = scmp.ne.s32.totalorder %s135, %s137
    %p141 = scmp.eq.s32.totalorder %s17, 0
    %p142 = por %p140, %p141
    %p143 = scmp.ne.s32.totalorder %s135, %s137
    %p144 = scmp.eq.s32.totalorder %s22, 2
    %p145 = por %p143, %p144
    %p146 = scmp.ne.s32.totalorder %s137, %s138
    %p147 = scmp.eq.s32.totalorder %s22, 0
    %p148 = por %p146, %p147
    %p149 = scmp.ne.s32.totalorder %s137, %s138
    %p150 = scmp.eq.s32.totalorder %s23, 2
    %p151 = por %p149, %p150
    %p153 = scmp.ne.s32.totalorder %s138, %s152
    %p154 = scmp.eq.s32.totalorder %s23, 0
    %p155 = por %p153, %p154
    %s157 = sadd.s32 %s156, 1
    %p160 = scmp.eq.s32.totalorder %s17, 2
    %p161 = scmp.ne.s32.totalorder %s156, %s158
    %p162 = scmp.eq.s32.totalorder %s17, 0
    %p163 = por %p161, %p162
    %p164 = scmp.ne.s32.totalorder %s156, %s158
    %p165 = scmp.eq.s32.totalorder %s22, 2
    %p166 = por %p164, %p165
    %p167 = scmp.ne.s32.totalorder %s158, %s159
    %p168 = scmp.eq.s32.totalorder %s22, 0
    %p169 = por %p167, %p168
    %p170 = scmp.ne.s32.totalorder %s158, %s159
    %p171 = scmp.eq.s32.totalorder %s23, 2
    %p172 = por %p170, %p171
    %p174 = scmp.ne.s32.totalorder %s159, %s173
    %p175 = scmp.eq.s32.totalorder %s23, 0
    %p176 = por %p174, %p175
    %s178 = sadd.s32 %s177, 1
    %p181 = scmp.eq.s32.totalorder %s17, 2
    %p182 = scmp.ne.s32.totalorder %s177, %s179
    %p183 = scmp.eq.s32.totalorder %s17, 0
    %p184 = por %p182, %p183
    %p185 = scmp.ne.s32.totalorder %s177, %s179
    %p186 = scmp.eq.s32.totalorder %s22, 2
    %p187 = por %p185, %p186
    %p188 = scmp.ne.s32.totalorder %s179, %s180
    %p189 = scmp.eq.s32.totalorder %s22, 0
    %p190 = por %p188, %p189
    %p191 = scmp.ne.s32.totalorder %s179, %s180
    %p192 = scmp.eq.s32.totalorder %s23, 2
    %p193 = por %p191, %p192
    %p195 = scmp.ne.s32.totalorder %s180, %s194
    %p196 = scmp.eq.s32.totalorder %s23, 0
    %p197 = por %p195, %p196
    %s199 = sadd.s32 %s198, 1
    %p202 = scmp.eq.s32.totalorder %s17, 2
    %p203 = scmp.ne.s32.totalorder %s198, %s200
    %p204 = scmp.eq.s32.totalorder %s17, 0
    %p205 = por %p203, %p204
    %p206 = scmp.ne.s32.totalorder %s198, %s200
    %p207 = scmp.eq.s32.totalorder %s22, 2
    %p208 = por %p206, %p207
    %p209 = scmp.ne.s32.totalorder %s200, %s201
    %p210 = scmp.eq.s32.totalorder %s22, 0
    %p211 = por %p209, %p210
    %p212 = scmp.ne.s32.totalorder %s200, %s201
    %p213 = scmp.eq.s32.totalorder %s23, 2
    %p214 = por %p212, %p213
    %p216 = scmp.ne.s32.totalorder %s201, %s215
    %p217 = scmp.eq.s32.totalorder %s23, 0
    %p218 = por %p216, %p217
    %s219 = ssub.s32 %s17, %s24
    %p220 = scmp.eq.s32.totalorder %s219, 0
    %s222 = sadd.s32 %s221, 1
    %s223 = scalar_select %p220, %s221, %s222
    %p226 = pneg %p220
    %p227 = scmp.eq.s32.totalorder %s17, 2
    %p228 = por %p226, %p227
    %p229 = scmp.ne.s32.totalorder %s221, %s224
    %p230 = scmp.eq.s32.totalorder %s17, 0
    %p231 = por %p229, %p230
    %p232 = scmp.ne.s32.totalorder %s221, %s224
    %p233 = scmp.eq.s32.totalorder %s22, 2
    %p234 = por %p232, %p233
    %p235 = scmp.ne.s32.totalorder %s224, %s225
    %p236 = scmp.eq.s32.totalorder %s22, 0
    %p237 = por %p235, %p236
    %p238 = scmp.ne.s32.totalorder %s224, %s225
    %p239 = scmp.eq.s32.totalorder %s23, 2
    %p240 = por %p238, %p239
    %p242 = scmp.ne.s32.totalorder %s225, %s241
    %p243 = scmp.eq.s32.totalorder %s23, 0
    %p244 = por %p242, %p243
    %p245 = scmp.le.s32.totalorder 1, %s17
    %p246 = scmp.lt.s32.totalorder %s17, 4
    %p247 = pnand %p245, %p246
    %p248 = pneg %p247
    // Predicated region
    $region9: #{tpu_custom_call.1} parent=5 // pred_check
      _
    $region10: #{tpu_custom_call.1} parent=5 // pred_check_branch
      %250 = sbr.rel (%p247) target = $region12
    $region11: #{tpu_custom_call.1} parent=5 // pred_region
      %s251 = ssub.s32 %s17, 1
      // Predicated region
      $region13: #{tpu_custom_call.1} parent=11 // pred_check
        %p252 = pneg %p64
      $region14: #{tpu_custom_call.1} parent=11 // pred_check_branch
        %254 = sbr.rel (%p252) target = $region16
      $region15: #{tpu_custom_call.1} parent=11 // pred_region
        _
      $region16: #{tpu_custom_call.1} parent=11 // pred_fallthru
        _
      // Predicated region
      $region17: #{tpu_custom_call.1} parent=11 // pred_check
        %p255 = pneg %p85
      $region18: #{tpu_custom_call.1} parent=11 // pred_check_branch
        %257 = sbr.rel (%p255) target = $region20
      $region19: #{tpu_custom_call.1} parent=11 // pred_region
        _
      $region20: #{tpu_custom_call.1} parent=11 // pred_fallthru
        _
      // Predicated region
      $region21: #{tpu_custom_call.1} parent=11 // pred_check
        %p258 = pneg %p106
      $region22: #{tpu_custom_call.1} parent=11 // pred_check_branch
        %260 = sbr.rel (%p258) target = $region24
      $region23: #{tpu_custom_call.1} parent=11 // pred_region
        _
      $region24: #{tpu_custom_call.1} parent=11 // pred_fallthru
        _
      // Predicated region
      $region25: #{tpu_custom_call.1} parent=11 // pred_check
        %p261 = pneg %p127
      $region26: #{tpu_custom_call.1} parent=11 // pred_check_branch
        %263 = sbr.rel (%p261) target = $region28
      $region27: #{tpu_custom_call.1} parent=11 // pred_region
        _
      $region28: #{tpu_custom_call.1} parent=11 // pred_fallthru
        _
      // Predicated region
      $region29: #{tpu_custom_call.1} parent=11 // pred_check
        %p264 = pneg %p148
      $region30: #{tpu_custom_call.1} parent=11 // pred_check_branch
        %266 = sbr.rel (%p264) target = $region32
      $region31: #{tpu_custom_call.1} parent=11 // pred_region
        _
      $region32: #{tpu_custom_call.1} parent=11 // pred_fallthru
        _
      // Predicated region
      $region33: #{tpu_custom_call.1} parent=11 // pred_check
        %p267 = pneg %p169
      $region34: #{tpu_custom_call.1} parent=11 // pred_check_branch
        %269 = sbr.rel (%p267) target = $region36
      $region35: #{tpu_custom_call.1} parent=11 // pred_region
        _
      $region36: #{tpu_custom_call.1} parent=11 // pred_fallthru
        _
      // Predicated region
      $region37: #{tpu_custom_call.1} parent=11 // pred_check
        %p270 = pneg %p190
      $region38: #{tpu_custom_call.1} parent=11 // pred_check_branch
        %272 = sbr.rel (%p270) target = $region40
      $region39: #{tpu_custom_call.1} parent=11 // pred_region
        _
      $region40: #{tpu_custom_call.1} parent=11 // pred_fallthru
        _
      // Predicated region
      $region41: #{tpu_custom_call.1} parent=11 // pred_check
        %p273 = pneg %p211
      $region42: #{tpu_custom_call.1} parent=11 // pred_check_branch
        %275 = sbr.rel (%p273) target = $region44
      $region43: #{tpu_custom_call.1} parent=11 // pred_region
        _
      $region44: #{tpu_custom_call.1} parent=11 // pred_fallthru
        _
    $region12: #{tpu_custom_call.1} parent=5 // pred_fallthru
      _
    %p276 = scmp.lt.s32.totalorder %s17, 3
    // Predicated region
    $region45: #{tpu_custom_call.1} parent=5 // pred_check
      %p277 = pneg %p276
    $region46: #{tpu_custom_call.1} parent=5 // pred_check_branch
      %279 = sbr.rel (%p277) target = $region48
    $region47: #{tpu_custom_call.1} parent=5 // pred_region
      // Predicated region
      $region49: #{tpu_custom_call.1} parent=47 // pred_check
        %p280 = pneg %p37
      $region50: #{tpu_custom_call.1} parent=47 // pred_check_branch
        %282 = sbr.rel (%p280) target = $region52
      $region51: #{tpu_custom_call.1} parent=47 // pred_region
        %p283 = scmp.lt.s32.totalorder %s17, 2
        %s284 = scalar_select %p283, %s17, 2
        %s285 = smul.addr %s284, 4
        %s286 = scalar_lea.vmem %s0, %s285
      $region52: #{tpu_custom_call.1} parent=47 // pred_fallthru
        _
    $region48: #{tpu_custom_call.1} parent=5 // pred_fallthru
      _
    %p287 = scmp.le.s32.totalorder 1, %s17
    %p288 = scmp.lt.s32.totalorder %s17, 4
    %p289 = pnand %p287, %p288
    %p290 = pneg %p289
    // Predicated region
    $region53: #{tpu_custom_call.1} parent=5 // pred_check
      _
    $region54: #{tpu_custom_call.1} parent=5 // pred_check_branch
      %292 = sbr.rel (%p289) target = $region56
    $region55: #{tpu_custom_call.1} parent=5 // pred_region
      %s293 = ssub.s32 %s17, 1
      %p294 = scmp.lt.s32.totalorder %s22, 2
      %s295 = scalar_select %p294, %s22, 2
      %s296 = smul.addr %s295, 4
      %s297 = scalar_lea.vmem %s0, %s296
      %p298 = pneg %p43
      %p299 = pneg %p40
      %p300 = pneg %p64
      %p301 = pneg %p61
      %p302 = pneg %p85
      %p303 = pneg %p82
      %p304 = pneg %p106
      %p305 = pneg %p103
      %p306 = pneg %p127
      %p307 = pneg %p124
      %p308 = pneg %p148
      %p309 = pneg %p145
      %p310 = pneg %p169
      %p311 = pneg %p166
      %p312 = pneg %p190
      %p313 = pneg %p187
      %p314 = pneg %p211
      %p315 = pneg %p208
      %p316 = pneg %p237
      %p317 = pneg %p234
      %p318 = scmp.lt.s32.totalorder %s22, 2
      %s319 = scalar_select %p318, %s22, 2
      %s320 = smul.addr %s319, 8
      %s321 = scalar_lea.vmem %s9, %s320
      %p322 = scmp.lt.s32.totalorder %s22, 2
      %s323 = scalar_select %p322, %s22, 2
      %s324 = smul.addr %s323, 4
      %s325 = scalar_lea.vmem %s0, %s324
      %p326 = scmp.lt.s32.totalorder %s22, 2
      %s327 = scalar_select %p326, %s22, 2
      %s328 = smul.addr %s327, 8
      %s329 = scalar_lea.vmem %s9, %s328
      %v331 = vld [vmem:[%s325] sm:$0xf]
      %v332 = vld [vmem:[%s1] sm:$0xff]
      %v333 = vld [vmem:[%s1 + $0x8] sm:$0xff]
      %v334 = vld [vmem:[%s1 + $0x10] sm:$0xff]
      %v335 = vld [vmem:[%s1 + $0x18] sm:$0xff]
      %v336 = vld [vmem:[%s2] sm:$0x3]
      %v338 = vlaneseq
      %v339 = vshrl.u32 %v338, 7
      %v340 = vsub.s32 0, %v339
      %v341 = vrot.slane %v336, %v340
      %v342 = vlaneseq
      %v343 = vshrl.u32 %v342, 7
      %v344 = vsub.s32 1, %v343
      %v345 = vrot.slane %v336, %v344
      %v352 = vunpack.c.l.b16 %v332
      %v353 = vunpack.c.h.b16 %v332
      %v354 = vunpack.c.l.b16 %v333
      %v355 = vunpack.c.h.b16 %v333
      %v356 = vunpack.c.l.b16 %v334
      %v357 = vunpack.c.h.b16 %v334
      %v358 = vunpack.c.l.b16 %v335
      %v359 = vunpack.c.h.b16 %v335
      %v360 = vpack.c.b16 %v354, %v352
      %v361 = vpack.c.b16 %v355, %v353
      %v362 = vpack.c.b16 %v358, %v356
      %v363 = vpack.c.b16 %v359, %v357
      %vm366 = vcmask 252928
      %v368 = vsel %vm366, %v331, 0
      %vm370 = vcmask 1046528
      %vm371 = vcmask 1047552
      %v372 = vsel %vm370, 4294967295, 65535
      %v373 = vsel %vm371, %v372, 0
      %v375 = vand.u32 %v362, %v373
      %v378 = vand.u32 %v363, %v373
      %380 = vmatprep.subr.bf16.mxu0 %v361
      %381 = vmatpush1.bf16.msra.mxu0 %v360
      %382 = vmatprep.subr.bf16.mxu0 %v378
      %383 = vmatpush1.bf16.msra.mxu0 %v375
      %384 = vmatprep.subr.bf16.mxu0 0
      %385 = vmatpush1.bf16.msra.mxu0 0
      %386 = vmatprep.subr.bf16.mxu0 0
      %387 = vmatpush1.bf16.msra.mxu0 0
      %388 = vmatprep.subr.bf16.mxu0 0
      %389 = vmatpush1.bf16.msra.mxu0 0
      %390 = vmatprep.subr.bf16.mxu0 0
      %391 = vmatpush1.bf16.msra.mxu0 0
      %392 = vmatprep.subr.bf16.mxu0 0
      %393 = vmatpush1.bf16.msra.mxu0 0
      %394 = vmatprep.subr.bf16.mxu0 0
      %395 = vmatpush1.bf16.msra.mxu0 0
      %396 = vmatprep.subr.bf16.mxu0 0
      %397 = vmatpush1.bf16.msra.mxu0 0
      %398 = vmatprep.subr.bf16.mxu0 0
      %399 = vmatpush1.bf16.msra.mxu0 0
      %400 = vmatprep.subr.bf16.mxu0 0
      %401 = vmatpush1.bf16.msra.mxu0 0
      %402 = vmatprep.subr.bf16.mxu0 0
      %403 = vmatpush1.bf16.msra.mxu0 0
      %404 = vmatprep.subr.bf16.mxu0 0
      %405 = vmatpush1.bf16.msra.mxu0 0
      %406 = vmatprep.subr.bf16.mxu0 0
      %407 = vmatpush1.bf16.msra.mxu0 0
      %408 = vmatprep.subr.bf16.mxu0 0
      %409 = vmatpush1.bf16.msra.mxu0 0
      %410 = vmatprep.subr.bf16.mxu0 0
      %411 = vmatpush1.bf16.msra.mxu0 0
      %412 = vmatprep.mubr.bf16.mxu0 0
      %413 = vmatmul.mubr.bf16.gmra.mrb[0].mxu0 %v368
      %v414 = vpop.f32.mrb[0].mxu0
      %v415 = vadd.f32 %v341, %v414
      %v416 = vpop.f32.mrb[0].mxu0
      %v417 = vadd.f32 %v345, %v416
      %v418 = vpop.f32.mrb[0].mxu0
      %v419 = vpop.f32.mrb[0].mxu0
      %420 = vdwg.mxu0
      %v421 = vmax.f32 %v415, 0.0
      %v422 = vmax.f32 %v417, 0.0
      %425 = vrot.lane.b32.xlu0 %v421, 8
      %v426 = vpop.permute.xlu0 %425
      %427 = vrot.lane.b32.xlu0 %v422, 8
      %v428 = vpop.permute.xlu0 %427
      %vm429 = vcmask 64512
      %v430 = vsel %vm429, %v426, %v428
      %v432 = vmax.f32 %v421, %v430
      %v433 = vpack.c.bf16 %v432, %v432
      %v434 = vld [vmem:[%s3] sm:$0xf]
      %v435 = vld [vmem:[%s3 + $0x4] sm:$0xf]
      %v436 = vld [vmem:[%s3 + $0x8] sm:$0xf]
      %v437 = vld [vmem:[%s3 + $0xc] sm:$0xf]
      %v438 = vld [vmem:[%s3 + $0x10] sm:$0xf]
      %v439 = vld [vmem:[%s3 + $0x14] sm:$0xf]
      %v440 = vld [vmem:[%s3 + $0x18] sm:$0xf]
      %v441 = vld [vmem:[%s3 + $0x1c] sm:$0xf]
      %v442 = vld [vmem:[%s3 + $0x20] sm:$0xf]
      %v443 = vld [vmem:[%s3 + $0x24] sm:$0xf]
      %v444 = vld [vmem:[%s3 + $0x28] sm:$0xf]
      %v445 = vld [vmem:[%s3 + $0x2c] sm:$0xf]
      %v446 = vld [vmem:[%s3 + $0x30] sm:$0xf]
      %v447 = vld [vmem:[%s3 + $0x34] sm:$0xf]
      %v448 = vld [vmem:[%s3 + $0x38] sm:$0xf]
      %v449 = vld [vmem:[%s4] sm:$0x1]
      %v451 = vlaneseq
      %v452 = vshrl.u32 %v451, 7
      %v453 = vsub.s32 0, %v452
      %v454 = vrot.slane %v449, %v453
      %v471 = vunpack.c.l.b16 %v434
      %v472 = vunpack.c.l.b16 %v435
      %v473 = vunpack.c.l.b16 %v436
      %v474 = vunpack.c.l.b16 %v437
      %v475 = vunpack.c.l.b16 %v438
      %v476 = vunpack.c.l.b16 %v439
      %v477 = vunpack.c.l.b16 %v440
      %v478 = vunpack.c.l.b16 %v441
      %v479 = vunpack.c.l.b16 %v442
      %v480 = vunpack.c.l.b16 %v443
      %v481 = vunpack.c.l.b16 %v444
      %v482 = vunpack.c.l.b16 %v445
      %v483 = vunpack.c.l.b16 %v446
      %v484 = vunpack.c.l.b16 %v447
      %v485 = vunpack.c.l.b16 %v448
      %v486 = vpack.c.b16 %v472, %v471
      %v487 = vpack.c.b16 %v474, %v473
      %v488 = vpack.c.b16 %v476, %v475
      %v489 = vpack.c.b16 %v478, %v477
      %v490 = vpack.c.b16 %v480, %v479
      %v491 = vpack.c.b16 %v482, %v481
      %v492 = vpack.c.b16 %v484, %v483
      %v493 = vpack.c.b16 %v485, %v485
      %vm501 = vcmask 982016
      %v503 = vsel %vm501, %v433, 0
      %vm505 = vcmask 1043456
      %v507 = vsel %vm505, %v493, 0
      %509 = vmatprep.subr.bf16.mxu0 0
      %510 = vmatpush1.bf16.msra.mxu0 %v486
      %511 = vmatprep.subr.bf16.mxu0 0
      %512 = vmatpush1.bf16.msra.mxu0 %v487
      %513 = vmatprep.subr.bf16.mxu0 0
      %514 = vmatpush1.bf16.msra.mxu0 %v488
      %515 = vmatprep.subr.bf16.mxu0 0
      %516 = vmatpush1.bf16.msra.mxu0 %v489
      %517 = vmatprep.subr.bf16.mxu0 0
      %518 = vmatpush1.bf16.msra.mxu0 %v490
      %519 = vmatprep.subr.bf16.mxu0 0
      %520 = vmatpush1.bf16.msra.mxu0 %v491
      %521 = vmatprep.subr.bf16.mxu0 0
      %522 = vmatpush1.bf16.msra.mxu0 %v492
      %523 = vmatprep.subr.bf16.mxu0 0
      %524 = vmatpush1.bf16.msra.mxu0 %v507
      %525 = vmatprep.subr.bf16.mxu0 0
      %526 = vmatpush1.bf16.msra.mxu0 0
      %527 = vmatprep.subr.bf16.mxu0 0
      %528 = vmatpush1.bf16.msra.mxu0 0
      %529 = vmatprep.subr.bf16.mxu0 0
      %530 = vmatpush1.bf16.msra.mxu0 0
      %531 = vmatprep.subr.bf16.mxu0 0
      %532 = vmatpush1.bf16.msra.mxu0 0
      %533 = vmatprep.subr.bf16.mxu0 0
      %534 = vmatpush1.bf16.msra.mxu0 0
      %535 = vmatprep.subr.bf16.mxu0 0
      %536 = vmatpush1.bf16.msra.mxu0 0
      %537 = vmatprep.subr.bf16.mxu0 0
      %538 = vmatpush1.bf16.msra.mxu0 0
      %539 = vmatprep.subr.bf16.mxu0 0
      %540 = vmatpush1.bf16.msra.mxu0 0
      %541 = vmatprep.mubr.bf16.mxu0 0
      %542 = vmatmul.mubr.bf16.gmra.mrb[0].mxu0 %v503
      %v543 = vpop.f32.mrb[0].mxu0
      %v544 = vadd.f32 %v454, %v543
      %v545 = vpop.f32.mrb[0].mxu0
      %v546 = vpop.f32.mrb[0].mxu0
      %v547 = vpop.f32.mrb[0].mxu0
      %548 = vdwg.mxu0
      %v549 = vmax.f32 %v544, 0.0
      %551 = vrot.lane.b32.xlu0 %v549, 72
      %v552 = vpop.permute.xlu0 %551
      %v554 = vmax.f32 %v549, %v552
      %v555 = vld [vmem:[%s5] sm:$0xff]
      %v556 = vld [vmem:[%s5 + $0x8] sm:$0xff]
      %v557 = vld [vmem:[%s5 + $0x10] sm:$0xff]
      %v558 = vld [vmem:[%s5 + $0x18] sm:$0xff]
      %v559 = vld [vmem:[%s5 + $0x20] sm:$0xff]
      %v560 = vld [vmem:[%s5 + $0x28] sm:$0xff]
      %v561 = vld [vmem:[%s5 + $0x30] sm:$0xff]
      %v562 = vld [vmem:[%s5 + $0x38] sm:$0xff]
      %v563 = vld [vmem:[%s5 + $0x40] sm:$0xff]
      %v564 = vld [vmem:[%s5 + $0x48] sm:$0xff]
      %v565 = vld [vmem:[%s5 + $0x50] sm:$0xff]
      %v566 = vld [vmem:[%s5 + $0x58] sm:$0xff]
      %v567 = vld [vmem:[%s5 + $0x60] sm:$0xff]
      %v568 = vld [vmem:[%s5 + $0x68] sm:$0xff]
      %v569 = vld [vmem:[%s6] sm:$0x3]
      %v571 = vlaneseq
      %v572 = vshrl.u32 %v571, 7
      %v573 = vsub.s32 0, %v572
      %v574 = vrot.slane %v569, %v573
      %v575 = vlaneseq
      %v576 = vshrl.u32 %v575, 7
      %v577 = vsub.s32 1, %v576
      %v578 = vrot.slane %v569, %v577
      %vm581 = vcmask 457728
      %v583 = vsel %vm581, %v554, 0
      %585 = vmatprep.subr.mxu0 %v556
      %586 = vmatpush1.msra.mxu0 %v555
      %587 = vmatprep.subr.mxu0 %v558
      %588 = vmatpush1.msra.mxu0 %v557
      %589 = vmatprep.subr.mxu0 %v560
      %590 = vmatpush1.msra.mxu0 %v559
      %591 = vmatprep.subr.mxu0 %v562
      %592 = vmatpush1.msra.mxu0 %v561
      %593 = vmatprep.subr.mxu0 %v564
      %594 = vmatpush1.msra.mxu0 %v563
      %595 = vmatprep.subr.mxu0 %v566
      %596 = vmatpush1.msra.mxu0 %v565
      %597 = vmatprep.subr.mxu0 %v568
      %598 = vmatpush1.msra.mxu0 %v567
      %599 = vmatprep.subr.mxu0 0.0
      %600 = vmatpush1.msra.mxu0 0.0
      %601 = vmatprep.subr.mxu0 0.0
      %602 = vmatpush1.msra.mxu0 0.0
      %603 = vmatprep.subr.mxu0 0.0
      %604 = vmatpush1.msra.mxu0 0.0
      %605 = vmatprep.subr.mxu0 0.0
      %606 = vmatpush1.msra.mxu0 0.0
      %607 = vmatprep.subr.mxu0 0.0
      %608 = vmatpush1.msra.mxu0 0.0
      %609 = vmatprep.subr.mxu0 0.0
      %610 = vmatpush1.msra.mxu0 0.0
      %611 = vmatprep.subr.mxu0 0.0
      %612 = vmatpush1.msra.mxu0 0.0
      %613 = vmatprep.subr.mxu0 0.0
      %614 = vmatpush1.msra.mxu0 0.0
      %615 = vmatprep.subr.mxu0 0.0
      %616 = vmatpush1.msra.mxu0 0.0
      %617 = vmatprep.subr.mxu0 0.0
      %618 = vmatpush1.msra.mxu0 0.0
      %619 = vmatprep.subr.mxu0 0.0
      %620 = vmatpush1.msra.mxu0 0.0
      %621 = vmatprep.subr.mxu0 0.0
      %622 = vmatpush1.msra.mxu0 0.0
      %623 = vmatprep.subr.mxu0 0.0
      %624 = vmatpush1.msra.mxu0 0.0
      %625 = vmatprep.subr.mxu0 0.0
      %626 = vmatpush1.msra.mxu0 0.0
      %627 = vmatprep.subr.mxu0 0.0
      %628 = vmatpush1.msra.mxu0 0.0
      %629 = vmatprep.subr.mxu0 0.0
      %630 = vmatpush1.msra.mxu0 0.0
      %631 = vmatprep.subr.mxu0 0.0
      %632 = vmatpush1.msra.mxu0 0.0
      %633 = vmatprep.subr.mxu0 0.0
      %634 = vmatpush1.msra.mxu0 0.0
      %635 = vmatprep.subr.mxu0 0.0
      %636 = vmatpush1.msra.mxu0 0.0
      %637 = vmatprep.subr.mxu0 0.0
      %638 = vmatpush1.msra.mxu0 0.0
      %639 = vmatprep.subr.mxu0 0.0
      %640 = vmatpush1.msra.mxu0 0.0
      %641 = vmatprep.subr.mxu0 0.0
      %642 = vmatpush1.msra.mxu0 0.0
      %643 = vmatprep.subr.mxu0 0.0
      %644 = vmatpush1.msra.mxu0 0.0
      %645 = vmatprep.subr.mxu0 0.0
      %646 = vmatpush1.msra.mxu0 0.0
      %647 = vmatprep.subr.mxu0 0.0
      %648 = vmatpush1.msra.mxu0 0.0
      %649 = vmatprep.mubr.f32.mxu0 0.0
      %650 = vmatmul.mubr.f32.gmra.mrb[0].mxu0 %v583
      %v651 = vpop.f32.mrb[0].mxu0
      %v652 = vadd.f32 %v574, %v651
      %v653 = vpop.f32.mrb[0].mxu0
      %v654 = vadd.f32 %v578, %v653
      %655 = vdwg.mxu0
      %v656 = vmax.f32 %v652, 0.0
      %v657 = vmax.f32 %v654, 0.0
      %v658 = vld [vmem:[%s7] sm:$0xff]
      %v659 = vld [vmem:[%s7 + $0x8] sm:$0xff]
      %v660 = vld [vmem:[%s7 + $0x10] sm:$0xff]
      %v661 = vld [vmem:[%s7 + $0x18] sm:$0xff]
      %v662 = vld [vmem:[%s7 + $0x20] sm:$0xff]
      %v663 = vld [vmem:[%s7 + $0x28] sm:$0xff]
      %v664 = vld [vmem:[%s7 + $0x30] sm:$0xff]
      %v665 = vld [vmem:[%s7 + $0x38] sm:$0xff]
      %v666 = vld [vmem:[%s7 + $0x40] sm:$0xff]
      %v667 = vld [vmem:[%s7 + $0x48] sm:$0xff]
      %v668 = vld [vmem:[%s7 + $0x50] sm:$0xff]
      %v669 = vld [vmem:[%s7 + $0x58] sm:$0xff]
      %v670 = vld [vmem:[%s7 + $0x60] sm:$0xff]
      %v671 = vld [vmem:[%s7 + $0x68] sm:$0xff]
      %v672 = vld [vmem:[%s7 + $0x70] sm:$0xff]
      %v673 = vld [vmem:[%s7 + $0x78] sm:$0xff]
      %v674 = vld [vmem:[%s7 + $0x80] sm:$0xff]
      %v675 = vld [vmem:[%s7 + $0x88] sm:$0xff]
      %v676 = vld [vmem:[%s7 + $0x90] sm:$0xff]
      %v677 = vld [vmem:[%s7 + $0x98] sm:$0xff]
      %v678 = vld [vmem:[%s7 + $0xa0] sm:$0xff]
      %v679 = vld [vmem:[%s7 + $0xa8] sm:$0xff]
      %v680 = vld [vmem:[%s7 + $0xb0] sm:$0xff]
      %v681 = vld [vmem:[%s7 + $0xb8] sm:$0xff]
      %v682 = vld [vmem:[%s7 + $0xc0] sm:$0xff]
      %v683 = vld [vmem:[%s7 + $0xc8] sm:$0xff]
      %v684 = vld [vmem:[%s7 + $0xd0] sm:$0xff]
      %v685 = vld [vmem:[%s7 + $0xd8] sm:$0xff]
      %v686 = vld [vmem:[%s7 + $0xe0] sm:$0xff]
      %v687 = vld [vmem:[%s7 + $0xe8] sm:$0xff]
      %v688 = vld [vmem:[%s7 + $0xf0] sm:$0xff]
      %v689 = vld [vmem:[%s7 + $0xf8] sm:$0xff]
      %v690 = vld [vmem:[#allocation2] sm:$0x1]
      %v692 = vlaneseq
      %v693 = vshrl.u32 %v692, 7
      %v694 = vsub.s32 0, %v693
      %v695 = vrot.slane %v690, %v694
      %697 = vmatprep.subr.mxu0 0.0
      %698 = vmatpush1.msra.mxu0 %v658
      %699 = vmatprep.subr.mxu0 0.0
      %700 = vmatpush1.msra.mxu0 %v659
      %701 = vmatprep.subr.mxu0 0.0
      %702 = vmatpush1.msra.mxu0 %v660
      %703 = vmatprep.subr.mxu0 0.0
      %704 = vmatpush1.msra.mxu0 %v661
      %705 = vmatprep.subr.mxu0 0.0
      %706 = vmatpush1.msra.mxu0 %v662
      %707 = vmatprep.subr.mxu0 0.0
      %708 = vmatpush1.msra.mxu0 %v663
      %709 = vmatprep.subr.mxu0 0.0
      %710 = vmatpush1.msra.mxu0 %v664
      %711 = vmatprep.subr.mxu0 0.0
      %712 = vmatpush1.msra.mxu0 %v665
      %713 = vmatprep.subr.mxu0 0.0
      %714 = vmatpush1.msra.mxu0 %v666
      %715 = vmatprep.subr.mxu0 0.0
      %716 = vmatpush1.msra.mxu0 %v667
      %717 = vmatprep.subr.mxu0 0.0
      %718 = vmatpush1.msra.mxu0 %v668
      %719 = vmatprep.subr.mxu0 0.0
      %720 = vmatpush1.msra.mxu0 %v669
      %721 = vmatprep.subr.mxu0 0.0
      %722 = vmatpush1.msra.mxu0 %v670
      %723 = vmatprep.subr.mxu0 0.0
      %724 = vmatpush1.msra.mxu0 %v671
      %725 = vmatprep.subr.mxu0 0.0
      %726 = vmatpush1.msra.mxu0 %v672
      %727 = vmatprep.subr.mxu0 0.0
      %728 = vmatpush1.msra.mxu0 %v673
      %729 = vmatprep.subr.mxu0 0.0
      %730 = vmatpush1.msra.mxu0 %v674
      %731 = vmatprep.subr.mxu0 0.0
      %732 = vmatpush1.msra.mxu0 %v675
      %733 = vmatprep.subr.mxu0 0.0
      %734 = vmatpush1.msra.mxu0 %v676
      %735 = vmatprep.subr.mxu0 0.0
      %736 = vmatpush1.msra.mxu0 %v677
      %737 = vmatprep.subr.mxu0 0.0
      %738 = vmatpush1.msra.mxu0 %v678
      %739 = vmatprep.subr.mxu0 0.0
      %740 = vmatpush1.msra.mxu0 %v679
      %741 = vmatprep.subr.mxu0 0.0
      %742 = vmatpush1.msra.mxu0 %v680
      %743 = vmatprep.subr.mxu0 0.0
      %744 = vmatpush1.msra.mxu0 %v681
      %745 = vmatprep.subr.mxu0 0.0
      %746 = vmatpush1.msra.mxu0 %v682
      %747 = vmatprep.subr.mxu0 0.0
      %748 = vmatpush1.msra.mxu0 %v683
      %749 = vmatprep.subr.mxu0 0.0
      %750 = vmatpush1.msra.mxu0 %v684
      %751 = vmatprep.subr.mxu0 0.0
      %752 = vmatpush1.msra.mxu0 %v685
      %753 = vmatprep.subr.mxu0 0.0
      %754 = vmatpush1.msra.mxu0 %v686
      %755 = vmatprep.subr.mxu0 0.0
      %756 = vmatpush1.msra.mxu0 %v687
      %757 = vmatprep.subr.mxu0 0.0
      %758 = vmatpush1.msra.mxu0 %v688
      %759 = vmatprep.subr.mxu0 0.0
      %760 = vmatpush1.msra.mxu0 %v689
      %761 = vmatprep.mubr.f32.mxu0 %v657
      %762 = vmatmul.mubr.f32.gmra.mrb[0].mxu0 %v656
      %v763 = vpop.f32.mrb[0].mxu0
      %v764 = vadd.f32 %v695, %v763
      %v765 = vpop.f32.mrb[0].mxu0
      %766 = vdwg.mxu0
      %v767 = vand.u32 2147483647, %v764
      %v768 = vsub.f32 0.0, %v767
      %v769 = vmul.f32 %v768, 1.442695
      %v770 = vpow.pop %v769
      %vm771 = vcmp.ge.f32.partialorder %v764, 0.0
      %v772 = vadd.f32 %v770, 1.0
      %v773 = vrcp.pop %v772
      %v774 = vmul.f32 1.0, %v773
      %v775 = vmul.f32 %v770, %v773
      %v776 = vsel %vm771, %v774, %v775
      %vm777 = vcmask 7168
      %778 = vst.msk [vmem:[%s329] sm:$0xff] %vm777, %v776
      %p779 = scmp.lt.s32.totalorder %s22, 2
      %s780 = scalar_select %p779, %s22, 2
      %s781 = smul.addr %s780, 8
      %s782 = scalar_lea.vmem %s9, %s781
      // Predicated region
      $region57: #{tpu_custom_call.1} parent=55 // pred_check
        %p783 = pneg %p234
      $region58: #{tpu_custom_call.1} parent=55 // pred_check_branch
        %785 = sbr.rel (%p783) target = $region60
      $region59: #{tpu_custom_call.1} parent=55 // pred_region
        _
      $region60: #{tpu_custom_call.1} parent=55 // pred_fallthru
        _
    $region56: #{tpu_custom_call.1} parent=5 // pred_fallthru
      _
    %p786 = scmp.le.s32.totalorder 2, %s17
    // Predicated region
    $region61: #{tpu_custom_call.1} parent=5 // pred_check
      %p787 = pneg %p786
    $region62: #{tpu_custom_call.1} parent=5 // pred_check_branch
      %789 = sbr.rel (%p787) target = $region64
    $region63: #{tpu_custom_call.1} parent=5 // pred_region
      %s790 = ssub.s32 %s17, 2
      // Predicated region
      $region65: #{tpu_custom_call.1} parent=63 // pred_check
        %p791 = pneg %p240
      $region66: #{tpu_custom_call.1} parent=63 // pred_check_branch
        %793 = sbr.rel (%p791) target = $region68
      $region67: #{tpu_custom_call.1} parent=63 // pred_region
        %p794 = scmp.lt.s32.totalorder %s23, 2
        %s795 = scalar_select %p794, %s23, 2
        %s796 = smul.addr %s795, 8
        %s797 = scalar_lea.vmem %s9, %s796
      $region68: #{tpu_custom_call.1} parent=63 // pred_fallthru
        _
    $region64: #{tpu_custom_call.1} parent=5 // pred_fallthru
      _
  $region6: #{tpu_custom_call.1} parent=0 // loop_footer
    %s21 = sadd.s32 1, %s17
  $region7: #{tpu_custom_call.1} parent=0 // loop_footer_branch
    %16 = sbr.rel target = $region3
  $region8: #{tpu_custom_call.1} parent=0 // loop_exit
    _

</llo_original>
